<compile_context>
chip_gen: v6e
topology: v6e:2x2x1
jax: 0.10.0
libtpu: 0.0.40
codegen_flags: <defaults>
</compile_context>

<pallas_src>
import functools

import jax
import jax.numpy as jnp
from jax.experimental import pallas as pl
from jax.experimental.pallas import tpu as pltpu


def _round_up(x, m):
    return ((x + m - 1) // m) * m


def _conv3x3_kernel(x_ref, w_ref, b_ref, o_ref, *, TH, n_row_tiles):
    # x_ref: (1, H_pad+2, Lpad) bf16 -- whole padded image, lane axis = (w, ci);
    #        index_map ignores the row-tile axis so it stays resident across t.
    # w_ref: (3, Lpad, WCo) bf16 -- banded per-dy weights (resident, 1 buffer).
    # b_ref: (1, WCo) f32 -- bias pre-tiled to the lane-dense output layout.
    # o_ref: (1, TH, WCo) -- lane-dense output row tile.
    if n_row_tiles == 1:
        xb = x_ref[0]                                      # (TH+2, Lpad)
    else:
        row0 = pl.multiple_of(pl.program_id(1) * TH, TH)   # tile-aligned start
        xb = x_ref[0, pl.ds(row0, TH + 2), :]              # (TH+2, Lpad)

    # Three MXU matmuls (K = Lpad, N = WCo); the dy shift is a static sublane
    # slice of the f32 results.  Sequential accumulation keeps peak live f32
    # at ~one (TH+2, WCo) product instead of three.
    acc = jnp.dot(xb, w_ref[0], preferred_element_type=jnp.float32)[0:TH]
    acc = acc + jnp.dot(xb, w_ref[1], preferred_element_type=jnp.float32)[1:TH + 1]
    acc = acc + jnp.dot(xb, w_ref[2], preferred_element_type=jnp.float32)[2:TH + 2]
    acc = acc + b_ref[...]
    o_ref[0] = acc.astype(o_ref.dtype)


def make_conv3x3_params(weight_oihw, bias, W):
    """Hoisted (per-weight-update) preprocessing: banded weights + tiled bias.

    B[dy][wp*C_in + ci, w*C_out + co] = K[dy, wp-w, ci, co] for wp-w in {0,1,2},
    zero otherwise; K rows are zero-padded up to a 128 multiple.
    """
    C_out, C_in, _, _ = weight_oihw.shape
    L = (W + 2) * C_in
    Lpad = _round_up(L, 128)
    WCo = W * C_out

    w_hwio = jnp.transpose(weight_oihw, (2, 3, 1, 0)).astype(jnp.float32)
    bands = []
    for dy in range(3):
        b_dy = sum(
            jnp.kron(jnp.eye(W + 2, W, k=-dx, dtype=jnp.float32), w_hwio[dy, dx])
            for dx in range(3))
        bands.append(b_dy)
    w_band = jnp.stack(bands, axis=0)                            # (3, L, WCo)
    w_band = jnp.pad(w_band, ((0, 0), (0, Lpad - L), (0, 0)))    # K -> Lpad
    w_band = w_band.astype(jnp.bfloat16)
    b_tiled = jnp.tile(bias.astype(jnp.float32), W).reshape(1, WCo)
    return w_band, b_tiled


@functools.partial(jax.jit, static_argnames=("use_refl",))
def conv3x3_apply(x_nchw, w_band, b_tiled, *, use_refl=True):
    """x_nchw: (N, C_in, H, W); (w_band, b_tiled) from make_conv3x3_params."""
    N, C_in, H, W = x_nchw.shape
    _, Lpad, WCo = w_band.shape
    C_out = WCo // W
    L = (W + 2) * C_in

    # Row tiling: target a 128-row MXU-friendly tile; pad ragged H up and
    # slice the tail off after the kernel.
    TH_TARGET = 128
    if H <= TH_TARGET:
        TH, T, H_pad = H, 1, H
    else:
        TH = TH_TARGET
        T = pl.cdiv(H, TH)
        H_pad = T * TH

    # ---- wrapper glue (XLA): layout, halo padding, lane padding -------------
    x_nhwc = jnp.transpose(x_nchw, (0, 2, 3, 1)).astype(jnp.bfloat16)
    pad_mode = "reflect" if use_refl else "constant"
    x_pad = jnp.pad(x_nhwc, ((0, 0), (1, 1), (1, 1), (0, 0)), mode=pad_mode)
    if H_pad != H:
        x_pad = jnp.pad(x_pad, ((0, 0), (0, H_pad - H), (0, 0), (0, 0)))
    x_flat = x_pad.reshape(N, H_pad + 2, L)       # free reshape: lane = (w, ci)
    if Lpad != L:
        x_flat = jnp.pad(x_flat, ((0, 0), (0, 0), (0, Lpad - L)))

    # ---- VMEM budget: actual buffer counts, clamped to physical VMEM --------
    out_itemsize = jnp.dtype(x_nchw.dtype).itemsize
    phys_vmem = 64 * 1024 * 1024                  # v7x floor if the query fails
    try:
        phys_vmem = int(getattr(pltpu.get_tpu_info(), "vmem_capacity_bytes",
                                phys_vmem))
    except Exception:
        pass
    x_block_bytes = (H_pad + 2) * Lpad * 2
    x_buffers = 1 if 2 * x_block_bytes > phys_vmem // 8 else 2
    est = (x_buffers * x_block_bytes              # resident padded image (bf16)
           + 3 * Lpad * WCo * 2                   # banded weights (1 buffer)
           + WCo * 4                              # bias (1 buffer)
           + 2 * TH * WCo * out_itemsize          # output tile, double-buffered
           + 2 * (TH + 2) * WCo * 4)              # f32 product / acc slack
    vmem_limit = int(min(max(2 * est, 8 * 1024 * 1024), (3 * phys_vmem) // 4))

    def _spec(shape, index_map, buffers):
        try:
            return pl.BlockSpec(shape, index_map,
                                pipeline_mode=pl.Buffered(buffers))
        except (TypeError, AttributeError):
            return pl.BlockSpec(shape, index_map)   # fall back to default buffering

    kernel = functools.partial(_conv3x3_kernel, TH=TH, n_row_tiles=T)

    out_flat = pl.pallas_call(
        kernel,
        out_shape=jax.ShapeDtypeStruct((N, H_pad, WCo), x_nchw.dtype),
        grid_spec=pltpu.PrefetchScalarGridSpec(
            num_scalar_prefetch=0,
            grid=(N, T),
            in_specs=[
                _spec((1, H_pad + 2, Lpad), lambda n, t: (n, 0, 0), x_buffers),
                _spec((3, Lpad, WCo), lambda n, t: (0, 0, 0), 1),
                _spec((1, WCo), lambda n, t: (0, 0), 1),
            ],
            out_specs=pl.BlockSpec((1, TH, WCo), lambda n, t: (n, t, 0)),
        ),
        compiler_params=pltpu.CompilerParams(
            dimension_semantics=("parallel", "arbitrary"),
            vmem_limit_bytes=vmem_limit),
    )(x_flat, w_band, b_tiled)

    out_nhwc = out_flat[:, :H].reshape(N, H, W, C_out)
    return jnp.transpose(out_nhwc, (0, 3, 1, 2))


def conv3x3_pallas(x_nchw, weight_oihw, bias, *, use_refl=True):
    """One-shot convenience wrapper (params NOT cached across calls)."""
    W = x_nchw.shape[3]
    w_band, b_tiled = make_conv3x3_params(weight_oihw, bias, W)
    return conv3x3_apply(x_nchw, w_band, b_tiled, use_refl=use_refl)


def conv3x3_ref(x_nchw, weight_oihw, bias, *, use_refl=True):
    """Pure-JAX f32 reference (mirrors PyTorch semantics)."""
    pad_mode = "reflect" if use_refl else "constant"
    x_pad = jnp.pad(x_nchw, ((0, 0), (0, 0), (1, 1), (1, 1)), mode=pad_mode)
    out = jax.lax.conv_general_dilated(
        x_pad, weight_oihw, window_strides=(1, 1), padding="VALID",
        dimension_numbers=("NCHW", "OIHW", "NCHW"))
    return out + bias.reshape(1, -1, 1, 1)


if __name__ == "__main__":
    key = jax.random.PRNGKey(0)
    keys = jax.random.split(key, 9)

    # Config 1: the module's small default shapes (reflection padding).
    N, C_in, H, W, C_out = 2, 4, 16, 16, 8
    x1 = jax.random.normal(keys[0], (N, C_in, H, W), dtype=jnp.float32)
    w1 = jax.random.normal(keys[1], (C_out, C_in, 3, 3), dtype=jnp.float32) * 0.1
    b1 = jax.random.normal(keys[2], (C_out,), dtype=jnp.float32) * 0.1

    p1 = make_conv3x3_params(w1, b1, W)                      # hoisted once
    out1 = jax.block_until_ready(conv3x3_apply(x1, *p1, use_refl=True))
    ref1 = jax.block_until_ready(conv3x3_ref(x1, w1, b1, use_refl=True))
    assert out1.shape == (N, C_out, H, W), out1.shape
    # bf16 activations/weights -> looser tolerance than pure-f32.
    assert jnp.allclose(out1, ref1, atol=5e-2, rtol=5e-2), (
        float(jnp.max(jnp.abs(out1 - ref1))))

    # Config 2: zero padding, wider output lanes (WCo = 384).
    N2, C_in2, H2, W2, C_out2 = 1, 3, 32, 24, 16
    x2 = jax.random.normal(keys[3], (N2, C_in2, H2, W2), dtype=jnp.float32)
    w2 = jax.random.normal(keys[4], (C_out2, C_in2, 3, 3), dtype=jnp.float32) * 0.1
    b2 = jax.random.normal(keys[5], (C_out2,), dtype=jnp.float32) * 0.1

    p2 = make_conv3x3_params(w2, b2, W2)
    out2 = jax.block_until_ready(conv3x3_apply(x2, *p2, use_refl=False))
    ref2 = jax.block_until_ready(conv3x3_ref(x2, w2, b2, use_refl=False))
    assert out2.shape == (N2, C_out2, H2, W2), out2.shape
    assert jnp.allclose(out2, ref2, atol=5e-2, rtol=5e-2), (
        float(jnp.max(jnp.abs(out2 - ref2))))

    # Config 3: exercises the TH=128 row-tiled path with ragged H (T=2).
    N3, C_in3, H3, W3, C_out3 = 1, 3, 144, 8, 8
    x3 = jax.random.normal(keys[6], (N3, C_in3, H3, W3), dtype=jnp.float32)
    w3 = jax.random.normal(keys[7], (C_out3, C_in3, 3, 3), dtype=jnp.float32) * 0.1
    b3 = jax.random.normal(keys[8], (C_out3,), dtype=jnp.float32) * 0.1

    p3 = make_conv3x3_params(w3, b3, W3)
    out3 = jax.block_until_ready(conv3x3_apply(x3, *p3, use_refl=True))
    ref3 = jax.block_until_ready(conv3x3_ref(x3, w3, b3, use_refl=True))
    assert out3.shape == (N3, C_out3, H3, W3), out3.shape
    assert jnp.allclose(out3, ref3, atol=5e-2, rtol=5e-2), (
        float(jnp.max(jnp.abs(out3 - ref3))))

    print("KERNEL_OK")
</pallas_src>

<mosaic_0001>
module attributes {stable_mosaic.version = 11 : i64} {
  func.func @_conv3x3_kernel(%arg0: i32, %arg1: i32, %arg2: memref<1x18x128xbf16, #tpu.memory_space<vmem>>, %arg3: memref<3x128x128xbf16, #tpu.memory_space<vmem>>, %arg4: memref<1x128xf32, #tpu.memory_space<vmem>>, %arg5: memref<1x16x128xf32, #tpu.memory_space<vmem>>) attributes {dimension_semantics = [#tpu.dimension_semantics<parallel>, #tpu.dimension_semantics<arbitrary>], iteration_bounds = array<i64: 2, 1>, scalar_prefetch = 0 : i64, scratch_operands = 0 : i64, tpu.core_type = #tpu.core_type<tc>, window_params = [{pipeline_mode = #tpu.pipeline_mode<double_buffered>, transform_indices = @transform_0, window_bounds = array<i64: 1, 18, 128>}, {pipeline_mode = #tpu.pipeline_mode<synchronous>, transform_indices = @transform_1, window_bounds = array<i64: 3, 128, 128>}, {pipeline_mode = #tpu.pipeline_mode<synchronous>, transform_indices = @transform_2, window_bounds = array<i64: 1, 128>}, {transform_indices = @transform_3, window_bounds = array<i64: 1, 16, 128>}]} {
    %c0 = arith.constant 0 : index
    %c0_0 = arith.constant 0 : index
    %c0_1 = arith.constant 0 : index
    %0 = vector.load %arg2[%c0, %c0_0, %c0_1] : memref<1x18x128xbf16, #tpu.memory_space<vmem>>, vector<1x18x128xbf16>
    %1 = vector.shape_cast %0 : vector<1x18x128xbf16> to vector<18x128xbf16>
    %c0_2 = arith.constant 0 : index
    %c0_3 = arith.constant 0 : index
    %c0_4 = arith.constant 0 : index
    %2 = vector.load %arg3[%c0_2, %c0_3, %c0_4] : memref<3x128x128xbf16, #tpu.memory_space<vmem>>, vector<1x128x128xbf16>
    %3 = vector.shape_cast %2 : vector<1x128x128xbf16> to vector<128x128xbf16>
    %cst = arith.constant dense<0.000000e+00> : vector<18x128xf32>
    %4 = tpu.matmul %1, %3, %cst {dimension_numbers = #tpu.dot_dimension_numbers<[1], [0], [0], [1], [0, 0, 1, 1], [], []>} : vector<18x128xbf16>, vector<128x128xbf16>, vector<18x128xf32> -> vector<18x128xf32>
    %5 = vector.extract_strided_slice %4 {offsets = [0, 0], sizes = [16, 128], strides = [1, 1]} : vector<18x128xf32> to vector<16x128xf32>
    %c1 = arith.constant 1 : index
    %c0_5 = arith.constant 0 : index
    %c0_6 = arith.constant 0 : index
    %6 = vector.load %arg3[%c1, %c0_5, %c0_6] : memref<3x128x128xbf16, #tpu.memory_space<vmem>>, vector<1x128x128xbf16>
    %7 = vector.shape_cast %6 : vector<1x128x128xbf16> to vector<128x128xbf16>
    %cst_7 = arith.constant dense<0.000000e+00> : vector<18x128xf32>
    %8 = tpu.matmul %1, %7, %cst_7 {dimension_numbers = #tpu.dot_dimension_numbers<[1], [0], [0], [1], [0, 0, 1, 1], [], []>} : vector<18x128xbf16>, vector<128x128xbf16>, vector<18x128xf32> -> vector<18x128xf32>
    %9 = vector.extract_strided_slice %8 {offsets = [1, 0], sizes = [16, 128], strides = [1, 1]} : vector<18x128xf32> to vector<16x128xf32>
    %10 = arith.addf %5, %9 : vector<16x128xf32>
    %c2 = arith.constant 2 : index
    %c0_8 = arith.constant 0 : index
    %c0_9 = arith.constant 0 : index
    %11 = vector.load %arg3[%c2, %c0_8, %c0_9] : memref<3x128x128xbf16, #tpu.memory_space<vmem>>, vector<1x128x128xbf16>
    %12 = vector.shape_cast %11 : vector<1x128x128xbf16> to vector<128x128xbf16>
    %cst_10 = arith.constant dense<0.000000e+00> : vector<18x128xf32>
    %13 = tpu.matmul %1, %12, %cst_10 {dimension_numbers = #tpu.dot_dimension_numbers<[1], [0], [0], [1], [0, 0, 1, 1], [], []>} : vector<18x128xbf16>, vector<128x128xbf16>, vector<18x128xf32> -> vector<18x128xf32>
    %14 = vector.extract_strided_slice %13 {offsets = [2, 0], sizes = [16, 128], strides = [1, 1]} : vector<18x128xf32> to vector<16x128xf32>
    %15 = arith.addf %10, %14 : vector<16x128xf32>
    %c0_11 = arith.constant 0 : index
    %c0_12 = arith.constant 0 : index
    %16 = vector.load %arg4[%c0_11, %c0_12] : memref<1x128xf32, #tpu.memory_space<vmem>>, vector<1x128xf32>
    %17 = vector.broadcast %16 : vector<1x128xf32> to vector<16x128xf32>
    %18 = arith.addf %15, %17 : vector<16x128xf32>
    %c0_13 = arith.constant 0 : index
    %c0_14 = arith.constant 0 : index
    %c0_15 = arith.constant 0 : index
    %19 = vector.load %arg5[%c0_13, %c0_14, %c0_15] : memref<1x16x128xf32, #tpu.memory_space<vmem>>, vector<1x16x128xf32>
    %20 = vector.shape_cast %19 : vector<1x16x128xf32> to vector<16x128xf32>
    %21 = vector.shape_cast %18 : vector<16x128xf32> to vector<1x16x128xf32>
    tpu.vector_store %arg5[%c0_13, %c0_14, %c0_15], %21 {strides = array<i32>} : memref<1x16x128xf32, #tpu.memory_space<vmem>>, vector<1x16x128xf32>,
    return
  }
  func.func @transform_0(%arg0: i32, %arg1: i32) -> (i32, i32, i32) {
    %c0_i32 = arith.constant 0 : i32
    %c0_i32_0 = arith.constant 0 : i32
    %c0_i32_1 = arith.constant 0 : i32
    return %arg0, %c0_i32, %c0_i32_0 : i32, i32, i32
  }
  func.func @transform_1(%arg0: i32, %arg1: i32) -> (i32, i32, i32) {
    %c0_i32 = arith.constant 0 : i32
    %c0_i32_0 = arith.constant 0 : i32
    %c0_i32_1 = arith.constant 0 : i32
    %c0_i32_2 = arith.constant 0 : i32
    return %c0_i32, %c0_i32_0, %c0_i32_1 : i32, i32, i32
  }
  func.func @transform_2(%arg0: i32, %arg1: i32) -> (i32, i32) {
    %c0_i32 = arith.constant 0 : i32
    %c0_i32_0 = arith.constant 0 : i32
    %c0_i32_1 = arith.constant 0 : i32
    return %c0_i32, %c0_i32_0 : i32, i32
  }
  func.func @transform_3(%arg0: i32, %arg1: i32) -> (i32, i32, i32) {
    %c0_i32 = arith.constant 0 : i32
    %c0_i32_0 = arith.constant 0 : i32
    return %arg0, %arg1, %c0_i32 : i32, i32, i32
  }
}

</mosaic_0001>

<llo_original>
// kernel: conv3x3_apply.1
$region0: #{conv3x3_apply.1}
  #allocation0 [shape = 'u32[]', space=smem, size = 0x4, offset = 0x4, fixed_abs, tag = 'smem constant byte address 0x4 - core index']
  #allocation1 [shape = 'u32[144,128]{1,0:T(1,128)}', space=vmem, size = 0x12000, scoped, tag = 'internal scratch']
  %s0 = inlined_call_operand.vmem [shape: bf16[2,18,128], index: 0, kind: input, shape index: {}]
  %s1 = inlined_call_operand.vmem [shape: bf16[3,128,128], index: 1, kind: input, shape index: {}]
  %s2 = inlined_call_operand.vmem [shape: f32[1,128], index: 2, kind: input, shape index: {}]
  %s3 = inlined_call_operand.vmem [shape: f32[2,16,128], index: 3, kind: output, shape index: {}]
  %s4 = sld [smem:[#allocation0]]
  $region45: #{conv3x3_apply.1} parent=0
    _
  %s6 = ssub.s32 1, %s4
  %s7 = scalar_select 0, %s6, %s4
  loop: start=0, step=1, limit=4
  $region2: #{conv3x3_apply.1} parent=0 // loop_pre_header
    _
  $region3: #{conv3x3_apply.1} parent=0 // loop_header
    %s9 = sphi 0, %s13
    %p10 = scmp.ge.s32.totalorder %s9, 4
    %s16 = sphi 0, %s28
    %s17 = sphi 0, %s24
    %s18 = sphi 0, %s16
    %s19 = sphi 0, %s17
    %s20 = sphi 0, %s18
    %s21 = sphi 0, %s19
    %s31 = sphi 0, %s33
    %s34 = sphi 0, %s31
    %s35 = sphi 0, %s34
    %s51 = sphi 0, %s35
    %s55 = sphi 0, %s55
    %s57 = sphi 0, %s55
    %s58 = sphi 0, %s57
    %s72 = sphi 0, %s58
    %s76 = sphi 0, %s76
    %s78 = sphi 0, %s76
    %s79 = sphi 0, %s78
    %s93 = sphi 0, %s79
    %s101 = sphi 0, %s103
    %s104 = sphi 0, %s101
    %s105 = sphi 0, %s104
    %s121 = sphi 0, %s105
  $region4: #{conv3x3_apply.1} parent=0 // loop_header_branch
    %12 = sbr.rel (%p10) target = $region8
  $region5: #{conv3x3_apply.1} parent=0 // loop_body
    %s14 = ssub.s32 %s9, 1
    %s15 = ssub.s32 %s9, 2
    %s22 = sadd.s32 1, %s17
    %p23 = scmp.ge.s32.totalorder %s22, 1
    %s24 = scalar_select %p23, 0, %s22
    %s25 = sadd.s32 1, %s16
    %s26 = scalar_select %p23, %s25, %s16
    %p27 = scmp.ge.s32.totalorder %s26, 2
    %s28 = scalar_select %p27, 0, %s26
    %s29 = ssub.s32 %s16, %s28
    %p30 = scmp.eq.s32.totalorder %s29, 0
    %s32 = sadd.s32 %s31, 1
    %s33 = scalar_select %p30, %s31, %s32
    %p36 = pneg %p30
    %p37 = scmp.eq.s32.totalorder %s9, 1
    %p38 = por %p36, %p37
    %p39 = scmp.ne.s32.totalorder %s31, %s34
    %p40 = scmp.eq.s32.totalorder %s9, 0
    %p41 = por %p39, %p40
    %p42 = scmp.ne.s32.totalorder %s31, %s34
    %p43 = scmp.eq.s32.totalorder %s14, 1
    %p44 = por %p42, %p43
    %p45 = scmp.ne.s32.totalorder %s34, %s35
    %p46 = scmp.eq.s32.totalorder %s14, 0
    %p47 = por %p45, %p46
    %p48 = scmp.ne.s32.totalorder %s34, %s35
    %p49 = scmp.eq.s32.totalorder %s15, 1
    %p50 = por %p48, %p49
    %p52 = scmp.ne.s32.totalorder %s35, %s51
    %p53 = scmp.eq.s32.totalorder %s15, 0
    %p54 = por %p52, %p53
    %s56 = sadd.s32 %s55, 1
    %p59 = scmp.eq.s32.totalorder %s9, 1
    %p60 = scmp.ne.s32.totalorder %s55, %s57
    %p61 = scmp.eq.s32.totalorder %s9, 0
    %p62 = por %p60, %p61
    %p63 = scmp.ne.s32.totalorder %s55, %s57
    %p64 = scmp.eq.s32.totalorder %s14, 1
    %p65 = por %p63, %p64
    %p66 = scmp.ne.s32.totalorder %s57, %s58
    %p67 = scmp.eq.s32.totalorder %s14, 0
    %p68 = por %p66, %p67
    %p69 = scmp.ne.s32.totalorder %s57, %s58
    %p70 = scmp.eq.s32.totalorder %s15, 1
    %p71 = por %p69, %p70
    %p73 = scmp.ne.s32.totalorder %s58, %s72
    %p74 = scmp.eq.s32.totalorder %s15, 0
    %p75 = por %p73, %p74
    %s77 = sadd.s32 %s76, 1
    %p80 = scmp.eq.s32.totalorder %s9, 1
    %p81 = scmp.ne.s32.totalorder %s76, %s78
    %p82 = scmp.eq.s32.totalorder %s9, 0
    %p83 = por %p81, %p82
    %p84 = scmp.ne.s32.totalorder %s76, %s78
    %p85 = scmp.eq.s32.totalorder %s14, 1
    %p86 = por %p84, %p85
    %p87 = scmp.ne.s32.totalorder %s78, %s79
    %p88 = scmp.eq.s32.totalorder %s14, 0
    %p89 = por %p87, %p88
    %p90 = scmp.ne.s32.totalorder %s78, %s79
    %p91 = scmp.eq.s32.totalorder %s15, 1
    %p92 = por %p90, %p91
    %p94 = scmp.ne.s32.totalorder %s79, %s93
    %p95 = scmp.eq.s32.totalorder %s15, 0
    %p96 = por %p94, %p95
    %s97 = ssub.s32 %s16, %s28
    %s98 = ssub.s32 %s17, %s24
    %s99 = sor.u32 %s97, %s98
    %p100 = scmp.eq.s32.totalorder %s99, 0
    %s102 = sadd.s32 %s101, 1
    %s103 = scalar_select %p100, %s101, %s102
    %p106 = pneg %p100
    %p107 = scmp.eq.s32.totalorder %s9, 1
    %p108 = por %p106, %p107
    %p109 = scmp.ne.s32.totalorder %s101, %s104
    %p110 = scmp.eq.s32.totalorder %s9, 0
    %p111 = por %p109, %p110
    %p112 = scmp.ne.s32.totalorder %s101, %s104
    %p113 = scmp.eq.s32.totalorder %s14, 1
    %p114 = por %p112, %p113
    %p115 = scmp.ne.s32.totalorder %s104, %s105
    %p116 = scmp.eq.s32.totalorder %s14, 0
    %p117 = por %p115, %p116
    %p118 = scmp.ne.s32.totalorder %s104, %s105
    %p119 = scmp.eq.s32.totalorder %s15, 1
    %p120 = por %p118, %p119
    %p122 = scmp.ne.s32.totalorder %s105, %s121
    %p123 = scmp.eq.s32.totalorder %s15, 0
    %p124 = por %p122, %p123
    %p125 = scmp.le.s32.totalorder 1, %s9
    %p126 = scmp.lt.s32.totalorder %s9, 3
    %p127 = pnand %p125, %p126
    %p128 = pneg %p127
    // Predicated region
    $region9: #{conv3x3_apply.1} parent=5 // pred_check
      _
    $region10: #{conv3x3_apply.1} parent=5 // pred_check_branch
      %130 = sbr.rel (%p127) target = $region12
    $region11: #{conv3x3_apply.1} parent=5 // pred_region
      %s131 = ssub.s32 %s9, 1
      // Predicated region
      $region13: #{conv3x3_apply.1} parent=11 // pred_check
        %p132 = pneg %p68
      $region14: #{conv3x3_apply.1} parent=11 // pred_check_branch
        %134 = sbr.rel (%p132) target = $region16
      $region15: #{conv3x3_apply.1} parent=11 // pred_region
        _
      $region16: #{conv3x3_apply.1} parent=11 // pred_fallthru
        _
      // Predicated region
      $region17: #{conv3x3_apply.1} parent=11 // pred_check
        %p135 = pneg %p89
      $region18: #{conv3x3_apply.1} parent=11 // pred_check_branch
        %137 = sbr.rel (%p135) target = $region20
      $region19: #{conv3x3_apply.1} parent=11 // pred_region
        _
      $region20: #{conv3x3_apply.1} parent=11 // pred_fallthru
        _
    $region12: #{conv3x3_apply.1} parent=5 // pred_fallthru
      _
    %p138 = scmp.lt.s32.totalorder %s9, 2
    // Predicated region
    $region21: #{conv3x3_apply.1} parent=5 // pred_check
      %p139 = pneg %p138
    $region22: #{conv3x3_apply.1} parent=5 // pred_check_branch
      %141 = sbr.rel (%p139) target = $region24
    $region23: #{conv3x3_apply.1} parent=5 // pred_region
      // Predicated region
      $region25: #{conv3x3_apply.1} parent=23 // pred_check
        %p142 = pneg %p41
      $region26: #{conv3x3_apply.1} parent=23 // pred_check_branch
        %144 = sbr.rel (%p142) target = $region28
      $region27: #{conv3x3_apply.1} parent=23 // pred_region
        %p145 = scmp.lt.s32.totalorder %s16, 1
        %s146 = scalar_select %p145, %s16, 1
        %s147 = smul.addr %s146, 3
        %s148 = smul.addr %s147, 4
        %s149 = scalar_lea.vmem %s0, %s148
      $region28: #{conv3x3_apply.1} parent=23 // pred_fallthru
        _
    $region24: #{conv3x3_apply.1} parent=5 // pred_fallthru
      _
    %p150 = scmp.le.s32.totalorder 1, %s9
    %p151 = scmp.lt.s32.totalorder %s9, 3
    %p152 = pnand %p150, %p151
    %p153 = pneg %p152
    // Predicated region
    $region29: #{conv3x3_apply.1} parent=5 // pred_check
      _
    $region30: #{conv3x3_apply.1} parent=5 // pred_check_branch
      %155 = sbr.rel (%p152) target = $region32
    $region31: #{conv3x3_apply.1} parent=5 // pred_region
      %s156 = ssub.s32 %s9, 1
      %p157 = scmp.lt.s32.totalorder %s18, 1
      %s158 = scalar_select %p157, %s18, 1
      %s159 = smul.addr %s158, 3
      %s160 = smul.addr %s159, 4
      %s161 = scalar_lea.vmem %s0, %s160
      %p162 = pneg %p47
      %p163 = pneg %p44
      %p164 = pneg %p68
      %p165 = pneg %p65
      %p166 = pneg %p89
      %p167 = pneg %p86
      %p168 = pneg %p117
      %p169 = pneg %p114
      %s170 = smul.u32 2, %s19
      %p171 = scmp.lt.s32.totalorder %s18, 1
      %s172 = scalar_select %p171, %s18, 1
      %p173 = scmp.lt.s32.totalorder %s170, 1
      %s174 = scalar_select %p173, %s170, 1
      %s175 = smul.addr %s172, 2
      %s176 = sadd.s32 %s174, %s175
      %s177 = smul.addr %s176, 8
      %s178 = scalar_lea.vmem %s3, %s177
      %p179 = scmp.lt.s32.totalorder %s18, 1
      %s180 = scalar_select %p179, %s18, 1
      %s181 = smul.addr %s180, 3
      %s182 = smul.addr %s181, 4
      %s183 = scalar_lea.vmem %s0, %s182
      %s184 = smul.u32 2, %s19
      %p185 = scmp.lt.s32.totalorder %s18, 1
      %s186 = scalar_select %p185, %s18, 1
      %p187 = scmp.lt.s32.totalorder %s184, 1
      %s188 = scalar_select %p187, %s184, 1
      %s189 = smul.addr %s186, 2
      %s190 = sadd.s32 %s188, %s189
      %s191 = smul.addr %s190, 8
      %s192 = scalar_lea.vmem %s3, %s191
      %s193 = smul.u32 2, %s19
      %v195 = vld [vmem:[%s183] sm:$0xf]
      %v196 = vld [vmem:[%s183 + $0x4] sm:$0xf]
      %v197 = vld [vmem:[%s183 + $0x8] sm:$0x1]
      %v198 = vld [vmem:[%s1] sm:$0xf]
      %v199 = vld [vmem:[%s1 + $0x4] sm:$0xf]
      %v200 = vld [vmem:[%s1 + $0x8] sm:$0xf]
      %v201 = vld [vmem:[%s1 + $0xc] sm:$0xf]
      %v202 = vld [vmem:[%s1 + $0x10] sm:$0xf]
      %v203 = vld [vmem:[%s1 + $0x14] sm:$0xf]
      %v204 = vld [vmem:[%s1 + $0x18] sm:$0xf]
      %v205 = vld [vmem:[%s1 + $0x1c] sm:$0xf]
      %v206 = vld [vmem:[%s1 + $0x20] sm:$0xf]
      %v207 = vld [vmem:[%s1 + $0x24] sm:$0xf]
      %v208 = vld [vmem:[%s1 + $0x28] sm:$0xf]
      %v209 = vld [vmem:[%s1 + $0x2c] sm:$0xf]
      %v210 = vld [vmem:[%s1 + $0x30] sm:$0xf]
      %v211 = vld [vmem:[%s1 + $0x34] sm:$0xf]
      %v212 = vld [vmem:[%s1 + $0x38] sm:$0xf]
      %v213 = vld [vmem:[%s1 + $0x3c] sm:$0xf]
      %v217 = vunpack.c.l.b16 %v195
      %v218 = vunpack.c.l.b16 %v196
      %v219 = vunpack.c.l.b16 %v197
      %v220 = vpack.c.b16 %v218, %v217
      %v221 = vpack.c.b16 %v219, %v219
      %v240 = vunpack.c.l.b16 %v198
      %v241 = vunpack.c.l.b16 %v199
      %v242 = vunpack.c.l.b16 %v200
      %v243 = vunpack.c.l.b16 %v201
      %v244 = vunpack.c.l.b16 %v202
      %v245 = vunpack.c.l.b16 %v203
      %v246 = vunpack.c.l.b16 %v204
      %v247 = vunpack.c.l.b16 %v205
      %v248 = vunpack.c.l.b16 %v206
      %v249 = vunpack.c.l.b16 %v207
      %v250 = vunpack.c.l.b16 %v208
      %v251 = vunpack.c.l.b16 %v209
      %v252 = vunpack.c.l.b16 %v210
      %v253 = vunpack.c.l.b16 %v211
      %v254 = vunpack.c.l.b16 %v212
      %v255 = vunpack.c.l.b16 %v213
      %v256 = vpack.c.b16 %v241, %v240
      %v257 = vpack.c.b16 %v243, %v242
      %v258 = vpack.c.b16 %v245, %v244
      %v259 = vpack.c.b16 %v247, %v246
      %v260 = vpack.c.b16 %v249, %v248
      %v261 = vpack.c.b16 %v251, %v250
      %v262 = vpack.c.b16 %v253, %v252
      %v263 = vpack.c.b16 %v255, %v254
      %272 = vmatprep.subr.bf16.mxu0 0
      %273 = vmatpush1.bf16.msra.mxu0 %v263
      %274 = vmatprep.subr.bf16.mxu0 0
      %275 = vmatpush1.bf16.msra.mxu0 %v262
      %276 = vmatprep.subr.bf16.mxu0 0
      %277 = vmatpush1.bf16.msra.mxu0 %v261
      %278 = vmatprep.subr.bf16.mxu0 0
      %279 = vmatpush1.bf16.msra.mxu0 %v260
      %280 = vmatprep.subr.bf16.mxu0 0
      %281 = vmatpush1.bf16.msra.mxu0 %v259
      %282 = vmatprep.subr.bf16.mxu0 0
      %283 = vmatpush1.bf16.msra.mxu0 %v258
      %284 = vmatprep.subr.bf16.mxu0 0
      %285 = vmatpush1.bf16.msra.mxu0 %v257
      %286 = vmatprep.subr.bf16.mxu0 0
      %287 = vmatpush1.bf16.msra.mxu0 %v256
      %288 = vmatprep.subr.bf16.mxu0 0
      %289 = vmatpush2.bf16.msra.mxu0 0
      %290 = vmatprep.subr.bf16.mxu0 0
      %291 = vmatpush2.bf16.msra.mxu0 0
      %292 = vmatprep.subr.bf16.mxu0 0
      %293 = vmatpush2.bf16.msra.mxu0 0
      %294 = vmatprep.subr.bf16.mxu0 0
      %295 = vmatpush2.bf16.msra.mxu0 0
      %296 = vmatprep.subr.bf16.mxu0 0
      %297 = vmatpush2.bf16.msra.mxu0 0
      %298 = vmatprep.subr.bf16.mxu0 0
      %299 = vmatpush2.bf16.msra.mxu0 0
      %300 = vmatprep.subr.bf16.mxu0 0
      %301 = vmatpush2.bf16.msra.mxu0 0
      %302 = vmatprep.subr.bf16.mxu0 0
      %303 = vmatpush2.bf16.msra.mxu0 0
      %304 = vmatprep.mubr.bf16.mxu0 0
      %305 = vmatmul.mubr.bf16.gmra.mxu0 %v220
      %v306 = vpop.f32.mrf.mxu0
      %v307 = vadd.f32 0.0, %v306
      %v308 = vpop.f32.mrf.mxu0
      %v309 = vpop.f32.mrf.mxu0
      %v310 = vadd.f32 0.0, %v309
      %v311 = vpop.f32.mrf.mxu0
      %312 = vmatprep.mubr.bf16.mxu0 0
      %313 = vmatmul.mubr.bf16.gmra.mxu0 %v221
      %v314 = vpop.f32.mrf.mxu0
      %v315 = vpop.f32.mrf.mxu0
      %v316 = vpop.f32.mrf.mxu0
      %v317 = vpop.f32.mrf.mxu0
      %318 = vdwg.mxu0
      %s319 = scalar_lea.vmem %s1, 64
      %v320 = vld [vmem:[%s319] sm:$0xf]
      %v321 = vld [vmem:[%s319 + $0x4] sm:$0xf]
      %v322 = vld [vmem:[%s319 + $0x8] sm:$0xf]
      %v323 = vld [vmem:[%s319 + $0xc] sm:$0xf]
      %v324 = vld [vmem:[%s319 + $0x10] sm:$0xf]
      %v325 = vld [vmem:[%s319 + $0x14] sm:$0xf]
      %v326 = vld [vmem:[%s319 + $0x18] sm:$0xf]
      %v327 = vld [vmem:[%s319 + $0x1c] sm:$0xf]
      %v328 = vld [vmem:[%s319 + $0x20] sm:$0xf]
      %v329 = vld [vmem:[%s319 + $0x24] sm:$0xf]
      %v330 = vld [vmem:[%s319 + $0x28] sm:$0xf]
      %v331 = vld [vmem:[%s319 + $0x2c] sm:$0xf]
      %v332 = vld [vmem:[%s319 + $0x30] sm:$0xf]
      %v333 = vld [vmem:[%s319 + $0x34] sm:$0xf]
      %v334 = vld [vmem:[%s319 + $0x38] sm:$0xf]
      %v335 = vld [vmem:[%s319 + $0x3c] sm:$0xf]
      %v352 = vunpack.c.l.b16 %v320
      %v353 = vunpack.c.l.b16 %v321
      %v354 = vunpack.c.l.b16 %v322
      %v355 = vunpack.c.l.b16 %v323
      %v356 = vunpack.c.l.b16 %v324
      %v357 = vunpack.c.l.b16 %v325
      %v358 = vunpack.c.l.b16 %v326
      %v359 = vunpack.c.l.b16 %v327
      %v360 = vunpack.c.l.b16 %v328
      %v361 = vunpack.c.l.b16 %v329
      %v362 = vunpack.c.l.b16 %v330
      %v363 = vunpack.c.l.b16 %v331
      %v364 = vunpack.c.l.b16 %v332
      %v365 = vunpack.c.l.b16 %v333
      %v366 = vunpack.c.l.b16 %v334
      %v367 = vunpack.c.l.b16 %v335
      %v368 = vpack.c.b16 %v353, %v352
      %v369 = vpack.c.b16 %v355, %v354
      %v370 = vpack.c.b16 %v357, %v356
      %v371 = vpack.c.b16 %v359, %v358
      %v372 = vpack.c.b16 %v361, %v360
      %v373 = vpack.c.b16 %v363, %v362
      %v374 = vpack.c.b16 %v365, %v364
      %v375 = vpack.c.b16 %v367, %v366
      %384 = vmatprep.subr.bf16.mxu0 0
      %385 = vmatpush1.bf16.msra.mxu0 %v375
      %386 = vmatprep.subr.bf16.mxu0 0
      %387 = vmatpush1.bf16.msra.mxu0 %v374
      %388 = vmatprep.subr.bf16.mxu0 0
      %389 = vmatpush1.bf16.msra.mxu0 %v373
      %390 = vmatprep.subr.bf16.mxu0 0
      %391 = vmatpush1.bf16.msra.mxu0 %v372
      %392 = vmatprep.subr.bf16.mxu0 0
      %393 = vmatpush1.bf16.msra.mxu0 %v371
      %394 = vmatprep.subr.bf16.mxu0 0
      %395 = vmatpush1.bf16.msra.mxu0 %v370
      %396 = vmatprep.subr.bf16.mxu0 0
      %397 = vmatpush1.bf16.msra.mxu0 %v369
      %398 = vmatprep.subr.bf16.mxu0 0
      %399 = vmatpush1.bf16.msra.mxu0 %v368
      %400 = vmatprep.subr.bf16.mxu0 0
      %401 = vmatpush2.bf16.msra.mxu0 0
      %402 = vmatprep.subr.bf16.mxu0 0
      %403 = vmatpush2.bf16.msra.mxu0 0
      %404 = vmatprep.subr.bf16.mxu0 0
      %405 = vmatpush2.bf16.msra.mxu0 0
      %406 = vmatprep.subr.bf16.mxu0 0
      %407 = vmatpush2.bf16.msra.mxu0 0
      %408 = vmatprep.subr.bf16.mxu0 0
      %409 = vmatpush2.bf16.msra.mxu0 0
      %410 = vmatprep.subr.bf16.mxu0 0
      %411 = vmatpush2.bf16.msra.mxu0 0
      %412 = vmatprep.subr.bf16.mxu0 0
      %413 = vmatpush2.bf16.msra.mxu0 0
      %414 = vmatprep.subr.bf16.mxu0 0
      %415 = vmatpush2.bf16.msra.mxu0 0
      %416 = vmatprep.mubr.bf16.mxu0 0
      %417 = vmatmul.mubr.bf16.gmra.mxu0 %v220
      %v418 = vpop.f32.mrf.mxu0
      %v419 = vadd.f32 0.0, %v418
      %v420 = vpop.f32.mrf.mxu0
      %v421 = vpop.f32.mrf.mxu0
      %v422 = vadd.f32 0.0, %v421
      %v423 = vpop.f32.mrf.mxu0
      %424 = vmatprep.mubr.bf16.mxu0 0
      %425 = vmatmul.mubr.bf16.gmra.mxu0 %v221
      %v426 = vpop.f32.mrf.mxu0
      %v427 = vadd.f32 0.0, %v426
      %v428 = vpop.f32.mrf.mxu0
      %v429 = vpop.f32.mrf.mxu0
      %v430 = vpop.f32.mrf.mxu0
      %431 = vdwg.mxu0
      %vm435 = vcmask 1046528
      %v436 = vrot.slane %v419, 1
      %v437 = vrot.slane %v422, 1
      %v438 = vsel %vm435, %v436, %v437
      %v439 = vrot.slane %v427, 1
      %v440 = vsel %vm435, %v437, %v439
      %v443 = vadd.f32 %v307, %v438
      %v444 = vadd.f32 %v310, %v440
      %s445 = scalar_lea.vmem %s1, 128
      %v446 = vld [vmem:[%s445] sm:$0xf]
      %v447 = vld [vmem:[%s445 + $0x4] sm:$0xf]
      %v448 = vld [vmem:[%s445 + $0x8] sm:$0xf]
      %v449 = vld [vmem:[%s445 + $0xc] sm:$0xf]
      %v450 = vld [vmem:[%s445 + $0x10] sm:$0xf]
      %v451 = vld [vmem:[%s445 + $0x14] sm:$0xf]
      %v452 = vld [vmem:[%s445 + $0x18] sm:$0xf]
      %v453 = vld [vmem:[%s445 + $0x1c] sm:$0xf]
      %v454 = vld [vmem:[%s445 + $0x20] sm:$0xf]
      %v455 = vld [vmem:[%s445 + $0x24] sm:$0xf]
      %v456 = vld [vmem:[%s445 + $0x28] sm:$0xf]
      %v457 = vld [vmem:[%s445 + $0x2c] sm:$0xf]
      %v458 = vld [vmem:[%s445 + $0x30] sm:$0xf]
      %v459 = vld [vmem:[%s445 + $0x34] sm:$0xf]
      %v460 = vld [vmem:[%s445 + $0x38] sm:$0xf]
      %v461 = vld [vmem:[%s445 + $0x3c] sm:$0xf]
      %v478 = vunpack.c.l.b16 %v446
      %v479 = vunpack.c.l.b16 %v447
      %v480 = vunpack.c.l.b16 %v448
      %v481 = vunpack.c.l.b16 %v449
      %v482 = vunpack.c.l.b16 %v450
      %v483 = vunpack.c.l.b16 %v451
      %v484 = vunpack.c.l.b16 %v452
      %v485 = vunpack.c.l.b16 %v453
      %v486 = vunpack.c.l.b16 %v454
      %v487 = vunpack.c.l.b16 %v455
      %v488 = vunpack.c.l.b16 %v456
      %v489 = vunpack.c.l.b16 %v457
      %v490 = vunpack.c.l.b16 %v458
      %v491 = vunpack.c.l.b16 %v459
      %v492 = vunpack.c.l.b16 %v460
      %v493 = vunpack.c.l.b16 %v461
      %v494 = vpack.c.b16 %v479, %v478
      %v495 = vpack.c.b16 %v481, %v480
      %v496 = vpack.c.b16 %v483, %v482
      %v497 = vpack.c.b16 %v485, %v484
      %v498 = vpack.c.b16 %v487, %v486
      %v499 = vpack.c.b16 %v489, %v488
      %v500 = vpack.c.b16 %v491, %v490
      %v501 = vpack.c.b16 %v493, %v492
      %510 = vmatprep.subr.bf16.mxu0 0
      %511 = vmatpush1.bf16.msra.mxu0 %v501
      %512 = vmatprep.subr.bf16.mxu0 0
      %513 = vmatpush1.bf16.msra.mxu0 %v500
      %514 = vmatprep.subr.bf16.mxu0 0
      %515 = vmatpush1.bf16.msra.mxu0 %v499
      %516 = vmatprep.subr.bf16.mxu0 0
      %517 = vmatpush1.bf16.msra.mxu0 %v498
      %518 = vmatprep.subr.bf16.mxu0 0
      %519 = vmatpush1.bf16.msra.mxu0 %v497
      %520 = vmatprep.subr.bf16.mxu0 0
      %521 = vmatpush1.bf16.msra.mxu0 %v496
      %522 = vmatprep.subr.bf16.mxu0 0
      %523 = vmatpush1.bf16.msra.mxu0 %v495
      %524 = vmatprep.subr.bf16.mxu0 0
      %525 = vmatpush1.bf16.msra.mxu0 %v494
      %526 = vmatprep.subr.bf16.mxu0 0
      %527 = vmatpush2.bf16.msra.mxu0 0
      %528 = vmatprep.subr.bf16.mxu0 0
      %529 = vmatpush2.bf16.msra.mxu0 0
      %530 = vmatprep.subr.bf16.mxu0 0
      %531 = vmatpush2.bf16.msra.mxu0 0
      %532 = vmatprep.subr.bf16.mxu0 0
      %533 = vmatpush2.bf16.msra.mxu0 0
      %534 = vmatprep.subr.bf16.mxu0 0
      %535 = vmatpush2.bf16.msra.mxu0 0
      %536 = vmatprep.subr.bf16.mxu0 0
      %537 = vmatpush2.bf16.msra.mxu0 0
      %538 = vmatprep.subr.bf16.mxu0 0
      %539 = vmatpush2.bf16.msra.mxu0 0
      %540 = vmatprep.subr.bf16.mxu0 0
      %541 = vmatpush2.bf16.msra.mxu0 0
      %542 = vmatprep.mubr.bf16.mxu0 0
      %543 = vmatmul.mubr.bf16.gmra.mxu0 %v220
      %v544 = vpop.f32.mrf.mxu0
      %v545 = vadd.f32 0.0, %v544
      %v546 = vpop.f32.mrf.mxu0
      %v547 = vpop.f32.mrf.mxu0
      %v548 = vadd.f32 0.0, %v547
      %v549 = vpop.f32.mrf.mxu0
      %550 = vmatprep.mubr.bf16.mxu0 0
      %551 = vmatmul.mubr.bf16.gmra.mxu0 %v221
      %v552 = vpop.f32.mrf.mxu0
      %v553 = vadd.f32 0.0, %v552
      %v554 = vpop.f32.mrf.mxu0
      %v555 = vpop.f32.mrf.mxu0
      %v556 = vpop.f32.mrf.mxu0
      %557 = vdwg.mxu0
      %vm561 = vcmask 1045504
      %v562 = vrot.slane %v545, 2
      %v563 = vrot.slane %v548, 2
      %v564 = vsel %vm561, %v562, %v563
      %v565 = vrot.slane %v553, 2
      %v566 = vsel %vm561, %v563, %v565
      %v569 = vadd.f32 %v443, %v564
      %v570 = vadd.f32 %v444, %v566
      %v571 = vld [vmem:[%s2] sm:$0x1]
      %v573 = vlaneseq
      %v574 = vshrl.u32 %v573, 7
      %v575 = vsub.s32 0, %v574
      %v576 = vrot.slane %v571, %v575
      %v578 = vadd.f32 %v569, %v576
      %v579 = vadd.f32 %v570, %v576
      %580 = vst [vmem:[%s192] sm:$0xff] %v578
      %581 = vst [vmem:[%s192 + $0x8] sm:$0xff] %v579
      %s582 = smul.u32 2, %s19
      %p583 = scmp.lt.s32.totalorder %s18, 1
      %s584 = scalar_select %p583, %s18, 1
      %p585 = scmp.lt.s32.totalorder %s582, 1
      %s586 = scalar_select %p585, %s582, 1
      %s587 = smul.addr %s584, 2
      %s588 = sadd.s32 %s586, %s587
      %s589 = smul.addr %s588, 8
      %s590 = scalar_lea.vmem %s3, %s589
      // Predicated region
      $region33: #{conv3x3_apply.1} parent=31 // pred_check
        %p591 = pneg %p114
      $region34: #{conv3x3_apply.1} parent=31 // pred_check_branch
        %593 = sbr.rel (%p591) target = $region36
      $region35: #{conv3x3_apply.1} parent=31 // pred_region
        %s594 = smul.u32 2, %s19
      $region36: #{conv3x3_apply.1} parent=31 // pred_fallthru
        _
    $region32: #{conv3x3_apply.1} parent=5 // pred_fallthru
      _
    %p595 = scmp.le.s32.totalorder 2, %s9
    // Predicated region
    $region37: #{conv3x3_apply.1} parent=5 // pred_check
      %p596 = pneg %p595
    $region38: #{conv3x3_apply.1} parent=5 // pred_check_branch
      %598 = sbr.rel (%p596) target = $region40
    $region39: #{conv3x3_apply.1} parent=5 // pred_region
      %s599 = ssub.s32 %s9, 2
      // Predicated region
      $region41: #{conv3x3_apply.1} parent=39 // pred_check
        %p600 = pneg %p120
      $region42: #{conv3x3_apply.1} parent=39 // pred_check_branch
        %602 = sbr.rel (%p600) target = $region44
      $region43: #{conv3x3_apply.1} parent=39 // pred_region
        %s603 = smul.u32 2, %s21
        %p604 = scmp.lt.s32.totalorder %s20, 1
        %s605 = scalar_select %p604, %s20, 1
        %p606 = scmp.lt.s32.totalorder %s603, 1
        %s607 = scalar_select %p606, %s603, 1
        %s608 = smul.addr %s605, 2
        %s609 = sadd.s32 %s607, %s608
        %s610 = smul.addr %s609, 8
        %s611 = scalar_lea.vmem %s3, %s610
      $region44: #{conv3x3_apply.1} parent=39 // pred_fallthru
        _
    $region40: #{conv3x3_apply.1} parent=5 // pred_fallthru
      _
  $region6: #{conv3x3_apply.1} parent=0 // loop_footer
    %s13 = sadd.s32 1, %s9
  $region7: #{conv3x3_apply.1} parent=0 // loop_footer_branch
    %8 = sbr.rel target = $region3
  $region8: #{conv3x3_apply.1} parent=0 // loop_exit
    _

</llo_original>
